<compile_context>
chip_gen: v7x
topology: tpu7x:2x2x1
jax: 0.10.0
libtpu: 0.0.40
codegen_flags: <defaults>
</compile_context>

<pallas_src>
import jax
import jax.numpy as jnp
from jax.experimental import pallas as pl
from jax.experimental.pallas import tpu as pltpu

_LANE = 128


def _round_up(x, n):
    return (x + n - 1) // n * n


def _sublane(dtype):
    # Rows per sublane group depend on dtype packing: f32 -> 8, bf16 -> 16, int8/fp8 -> 32.
    return {4: 8, 2: 16, 1: 32}.get(jnp.dtype(dtype).itemsize, 8)


def _choose_tn(hid, tb, q_inp, itemsize, budget=40 << 20):
    """Pick the hid tile. Full hid when it fits (or is not 128-aligned); otherwise
    halve along 128-multiples so the per-step working set respects v7x VMEM."""
    if hid % _LANE != 0:
        return hid  # block == full dim (masked stores); never pad hid.

    def blk_bytes(t):
        # double-buffered out tile + Q/cm tiles + one weight slab + f32 bias slab
        return (2 * tb * (t + q_inp + 2) + (q_inp + 2) * t) * itemsize + t * 4

    tn = hid
    while blk_bytes(tn) > budget and (tn // 2) % _LANE == 0:
        tn //= 2
    return tn


def _spec(shape, index_map, mode=None):
    # pipeline_mode=pl.Buffered(1) keeps truly-resident blocks single-buffered.
    # Fall back gracefully if this JAX version's BlockSpec lacks the kwarg.
    if mode is None:
        return pl.BlockSpec(shape, index_map)
    try:
        return pl.BlockSpec(shape, index_map, pipeline_mode=mode)
    except TypeError:
        return pl.BlockSpec(shape, index_map)


def lstm_emb_kernel(q_ref, cm_ref, wq_ref, wcm_ref, bsum_ref, o_ref):
    # MXU matmul with f32 accumulate; cqi/m ride along as two extra K columns.
    acc = jnp.dot(q_ref[...], wq_ref[...], preferred_element_type=jnp.float32)
    acc = acc + jnp.dot(cm_ref[...], wcm_ref[...], preferred_element_type=jnp.float32)
    acc = acc + bsum_ref[...]          # biases pre-summed, kept in f32
    o_ref[...] = acc.astype(o_ref.dtype)


def lstm_emb(Q, cqi, m, params, *, block_b=1024):
    """Fused LSTMEmb forward: emb_m(m) + emb_cqi(cqi) + emb_Q(Q).

    params: W_Q (Q_inp, hid), b_Q (1, hid), W_cqi (1, hid), b_cqi (1, hid),
            W_m (1, hid), b_m (1, hid). Weights stored (in_features, out_features).
    I/O dtype follows Q.dtype (use bf16 for production: this op is mem-bound)."""
    B, q_inp = Q.shape
    hid = params["W_Q"].shape[1]
    in_dtype = Q.dtype
    out_dtype = Q.dtype
    itemsize = jnp.dtype(in_dtype).itemsize

    # Batch tile: dtype-correct sublane multiple; no padding copies, ragged last
    # block is handled by Pallas (independent rows -> masked OOB writes are safe).
    sub = _sublane(in_dtype)
    tb = min(_round_up(block_b, sub), _round_up(B, sub))
    nb = pl.cdiv(B, tb)

    tn = _choose_tn(hid, tb, q_inp, itemsize)
    nh = hid // tn

    # Fold cqi/m into one (B, 2) input and stack their weights to (2, hid).
    cm = jnp.concatenate([cqi, m], axis=1).astype(in_dtype)
    W_cm = jnp.concatenate([params["W_cqi"], params["W_m"]], axis=0).astype(in_dtype)
    W_Q = params["W_Q"].astype(in_dtype)
    # Sum the three biases once, in f32 (kept f32-resident; tiny).
    b_sum = (params["b_Q"].astype(jnp.float32)
             + params["b_cqi"].astype(jnp.float32)
             + params["b_m"].astype(jnp.float32))

    # Weights/bias are resident (constant block index) only when hid is untiled.
    w_mode = pl.Buffered(1) if nh == 1 else None

    tile_b = lambda i, j: (i, 0)    # batch-streamed, hid-invariant
    tile_h = lambda i, j: (0, j)    # weights: follow hid tile only
    tile_bh = lambda i, j: (i, j)   # output

    # Corrected VMEM accounting: 2x streaming tiles (Q, cm, out) + weight slabs
    # (single-buffered when resident) + f32 bias, +30% margin.
    stream = 2 * tb * (q_inp + 2 + tn) * itemsize
    wbuf = 1 if nh == 1 else 2
    weights = wbuf * ((q_inp + 2) * tn * itemsize + tn * 4)
    vmem_limit = int(min(max(int(1.3 * (stream + weights)), 8 << 20), 48 << 20))

    cost = pl.CostEstimate(
        flops=2 * B * (q_inp + 2) * hid + B * hid,
        transcendentals=0,
        bytes_accessed=(Q.size + cm.size + W_Q.size + W_cm.size) * itemsize
                       + b_sum.size * 4
                       + B * hid * jnp.dtype(out_dtype).itemsize,
    )

    return pl.pallas_call(
        lstm_emb_kernel,
        out_shape=jax.ShapeDtypeStruct((B, hid), out_dtype),
        grid=(nb, nh),
        in_specs=[
            _spec((tb, q_inp), tile_b),               # Q tile (double-buffered)
            _spec((tb, 2), tile_b),                   # [cqi, m] tile
            _spec((q_inp, tn), tile_h, w_mode),       # W_Q (resident when nh==1)
            _spec((2, tn), tile_h, w_mode),           # [W_cqi; W_m]
            _spec((1, tn), tile_h, w_mode),           # summed bias (f32)
        ],
        out_specs=pl.BlockSpec((tb, tn), tile_bh),
        compiler_params=pltpu.CompilerParams(
            dimension_semantics=("parallel", "parallel"),  # no reduction axes
            vmem_limit_bytes=vmem_limit,
        ),
        cost_estimate=cost,
    )(Q, cm, W_Q, W_cm, b_sum)


def init_params(key, hid, q_inp, dtype=jnp.float32):
    """Synthetic init mirroring nn.Linear parameter shapes.
    Weights stored (in_features, out_features); biases (1, out)."""
    ks = jax.random.split(key, 6)

    def u(k, shape, fan_in):
        bound = 1.0 / jnp.sqrt(fan_in)
        return jax.random.uniform(k, shape, dtype, -bound, bound)

    return {
        "W_cqi": u(ks[0], (1, hid), 1.0),
        "b_cqi": u(ks[1], (1, hid), 1.0),
        "W_m":   u(ks[2], (1, hid), 1.0),
        "b_m":   u(ks[3], (1, hid), 1.0),
        "W_Q":   u(ks[4], (q_inp, hid), float(q_inp)),
        "b_Q":   u(ks[5], (1, hid), float(q_inp)),
    }


def lstm_emb_ref(Q, cqi, m, p):
    # Pure-JAX reference (mirrors the PyTorch forward exactly).
    emb_Q = Q @ p["W_Q"] + p["b_Q"]
    emb_cqi = cqi @ p["W_cqi"] + p["b_cqi"]
    emb_m = m @ p["W_m"] + p["b_m"]
    return emb_m + emb_cqi + emb_Q


if __name__ == "__main__":
    run = jax.jit(lstm_emb)

    # --- f32 path: tight-tolerance correctness check ---
    B, Q_inp, hid = 8, 16, 32
    kq, kc, km, kp = jax.random.split(jax.random.PRNGKey(0), 4)
    Q = jax.random.normal(kq, (B, Q_inp), jnp.float32)
    cqi = jax.random.normal(kc, (B, 1), jnp.float32)
    m = jax.random.normal(km, (B, 1), jnp.float32)
    params = init_params(kp, hid, Q_inp, jnp.float32)

    out = jax.block_until_ready(run(Q, cqi, m, params))
    ref = lstm_emb_ref(Q, cqi, m, params)
    assert out.shape == (B, hid)
    assert jnp.allclose(out, ref, atol=1e-5, rtol=1e-5), "f32 mismatch vs reference"

    # --- bf16 I/O path (the production default: halves HBM bytes on this
    #     memory-bound op; f32 MXU accumulate keeps error at bf16 rounding) ---
    Bb, Qb, hb = 16, 16, 128
    kq, kc, km, kp = jax.random.split(jax.random.PRNGKey(1), 4)
    Qh = jax.random.normal(kq, (Bb, Qb), jnp.float32).astype(jnp.bfloat16)
    cqih = jax.random.normal(kc, (Bb, 1), jnp.float32).astype(jnp.bfloat16)
    mh = jax.random.normal(km, (Bb, 1), jnp.float32).astype(jnp.bfloat16)
    params16 = jax.tree.map(lambda p: p.astype(jnp.bfloat16),
                            init_params(kp, hb, Qb, jnp.float32))

    out16 = jax.block_until_ready(run(Qh, cqih, mh, params16))
    ref16 = lstm_emb_ref(Qh.astype(jnp.float32), cqih.astype(jnp.float32),
                         mh.astype(jnp.float32),
                         jax.tree.map(lambda p: p.astype(jnp.float32), params16))
    assert out16.shape == (Bb, hb) and out16.dtype == jnp.bfloat16
    assert jnp.allclose(out16.astype(jnp.float32), ref16, atol=3e-2, rtol=3e-2), \
        "bf16 mismatch vs reference"

    print("KERNEL_OK")
</pallas_src>

<mosaic_0001>
module attributes {stable_mosaic.version = 11 : i64} {
  func.func @lstm_emb_kernel(%arg0: i32, %arg1: i32, %arg2: memref<8x16xf32, #tpu.memory_space<vmem>>, %arg3: memref<8x2xf32, #tpu.memory_space<vmem>>, %arg4: memref<16x32xf32, #tpu.memory_space<vmem>>, %arg5: memref<2x32xf32, #tpu.memory_space<vmem>>, %arg6: memref<1x32xf32, #tpu.memory_space<vmem>>, %arg7: memref<8x32xf32, #tpu.memory_space<vmem>>) attributes {dimension_semantics = [#tpu.dimension_semantics<parallel>, #tpu.dimension_semantics<parallel>], iteration_bounds = array<i64: 1, 1>, scalar_prefetch = 0 : i64, scratch_operands = 0 : i64, tpu.core_type = #tpu.core_type<tc>, window_params = [{transform_indices = @transform_0, window_bounds = array<i64: 8, 16>}, {transform_indices = @transform_1, window_bounds = array<i64: 8, 2>}, {pipeline_mode = #tpu.pipeline_mode<synchronous>, transform_indices = @transform_2, window_bounds = array<i64: 16, 32>}, {pipeline_mode = #tpu.pipeline_mode<synchronous>, transform_indices = @transform_3, window_bounds = array<i64: 2, 32>}, {pipeline_mode = #tpu.pipeline_mode<synchronous>, transform_indices = @transform_4, window_bounds = array<i64: 1, 32>}, {transform_indices = @transform_5, window_bounds = array<i64: 8, 32>}]} {
    %c0 = arith.constant 0 : index
    %c0_0 = arith.constant 0 : index
    %0 = vector.load %arg2[%c0, %c0_0] : memref<8x16xf32, #tpu.memory_space<vmem>>, vector<8x16xf32>
    %c0_1 = arith.constant 0 : index
    %c0_2 = arith.constant 0 : index
    %1 = vector.load %arg4[%c0_1, %c0_2] : memref<16x32xf32, #tpu.memory_space<vmem>>, vector<16x32xf32>
    %cst = arith.constant dense<0.000000e+00> : vector<8x32xf32>
    %2 = tpu.matmul %0, %1, %cst {dimension_numbers = #tpu.dot_dimension_numbers<[1], [0], [0], [1], [0, 0, 1, 1], [], []>} : vector<8x16xf32>, vector<16x32xf32>, vector<8x32xf32> -> vector<8x32xf32>
    %c0_3 = arith.constant 0 : index
    %c0_4 = arith.constant 0 : index
    %3 = vector.load %arg3[%c0_3, %c0_4] : memref<8x2xf32, #tpu.memory_space<vmem>>, vector<8x2xf32>
    %c0_5 = arith.constant 0 : index
    %c0_6 = arith.constant 0 : index
    %4 = vector.load %arg5[%c0_5, %c0_6] : memref<2x32xf32, #tpu.memory_space<vmem>>, vector<2x32xf32>
    %cst_7 = arith.constant dense<0.000000e+00> : vector<8x32xf32>
    %5 = tpu.matmul %3, %4, %cst_7 {dimension_numbers = #tpu.dot_dimension_numbers<[1], [0], [0], [1], [0, 0, 1, 1], [], []>} : vector<8x2xf32>, vector<2x32xf32>, vector<8x32xf32> -> vector<8x32xf32>
    %6 = arith.addf %2, %5 : vector<8x32xf32>
    %c0_8 = arith.constant 0 : index
    %c0_9 = arith.constant 0 : index
    %7 = vector.load %arg6[%c0_8, %c0_9] : memref<1x32xf32, #tpu.memory_space<vmem>>, vector<1x32xf32>
    %8 = vector.broadcast %7 : vector<1x32xf32> to vector<8x32xf32>
    %9 = arith.addf %6, %8 : vector<8x32xf32>
    %c0_10 = arith.constant 0 : index
    %c0_11 = arith.constant 0 : index
    %10 = vector.load %arg7[%c0_10, %c0_11] : memref<8x32xf32, #tpu.memory_space<vmem>>, vector<8x32xf32>
    tpu.vector_store %arg7[%c0_10, %c0_11], %9 {strides = array<i32>} : memref<8x32xf32, #tpu.memory_space<vmem>>, vector<8x32xf32>,
    return
  }
  func.func @transform_0(%arg0: i32, %arg1: i32) -> (i32, i32) {
    %c0_i32 = arith.constant 0 : i32
    %c0_i32_0 = arith.constant 0 : i32
    return %arg0, %c0_i32 : i32, i32
  }
  func.func @transform_1(%arg0: i32, %arg1: i32) -> (i32, i32) {
    %c0_i32 = arith.constant 0 : i32
    %c0_i32_0 = arith.constant 0 : i32
    return %arg0, %c0_i32 : i32, i32
  }
  func.func @transform_2(%arg0: i32, %arg1: i32) -> (i32, i32) {
    %c0_i32 = arith.constant 0 : i32
    %c0_i32_0 = arith.constant 0 : i32
    return %c0_i32, %arg1 : i32, i32
  }
  func.func @transform_3(%arg0: i32, %arg1: i32) -> (i32, i32) {
    %c0_i32 = arith.constant 0 : i32
    %c0_i32_0 = arith.constant 0 : i32
    return %c0_i32, %arg1 : i32, i32
  }
  func.func @transform_4(%arg0: i32, %arg1: i32) -> (i32, i32) {
    %c0_i32 = arith.constant 0 : i32
    %c0_i32_0 = arith.constant 0 : i32
    return %c0_i32, %arg1 : i32, i32
  }
  func.func @transform_5(%arg0: i32, %arg1: i32) -> (i32, i32) {
    %c0_i32 = arith.constant 0 : i32
    return %arg0, %arg1 : i32, i32
  }
}

</mosaic_0001>

<llo_original>
// kernel: lstm_emb.1
$region0: #{lstm_emb.1}
  #allocation0 [shape = 'u32[]', space=smem, size = 0x4, offset = 0x4, fixed_abs, tag = 'smem constant byte address 0x4 - core index']
  #allocation1 [shape = 'u32[144,128]{1,0:T(1,128)}', space=vmem, size = 0x12000, scoped, tag = 'internal scratch']
  %s0 = inlined_call_operand.vmem [shape: f32[8,16], index: 0, kind: input, shape index: {}]
  %s1 = inlined_call_operand.vmem [shape: f32[8,2], index: 1, kind: input, shape index: {}]
  %s2 = inlined_call_operand.vmem [shape: f32[16,32], index: 2, kind: input, shape index: {}]
  %s3 = inlined_call_operand.vmem [shape: f32[2,32], index: 3, kind: input, shape index: {}]
  %s4 = inlined_call_operand.vmem [shape: f32[1,32], index: 4, kind: input, shape index: {}]
  %s5 = inlined_call_operand.hbm [shape: f32[8,32], index: 5, kind: output, shape index: {}]
  %s6 = sld [smem:[#allocation0]]
  $region30: #{lstm_emb.1} parent=0
    _
  %s8 = ssub.s32 1, %s6
  %s9 = scalar_select 0, %s8, %s6
  $region1: #{lstm_emb.1} parent=0
    #allocation2 [shape = 'u8[4096]{0}', space=vmem, size = 0x1000, scoped, tag = 'output window, operand 0, single buffered']
    #allocation3 [shape = 's32[1]{0}', space=sflag, size = 0x4, scoped, tag = 'scoped memory for lstm_emb.1']
    %10 = vsyncpa [#allocation3], 0
    // Predicated region
    $region2: #{lstm_emb.1} parent=1 // pred_check
      _
    $region3: #{lstm_emb.1} parent=1 // pred_check_branch
      %12 = sbr.rel (0) target = $region5
    $region4: #{lstm_emb.1} parent=1 // pred_region
      _
    $region5: #{lstm_emb.1} parent=1 // pred_fallthru
      _
    // Predicated region
    $region6: #{lstm_emb.1} parent=1 // pred_check
      _
    $region7: #{lstm_emb.1} parent=1 // pred_check_branch
      %14 = sbr.rel (0) target = $region9
    $region8: #{lstm_emb.1} parent=1 // pred_region
      _
    $region9: #{lstm_emb.1} parent=1 // pred_fallthru
      _
    // Predicated region
    $region10: #{lstm_emb.1} parent=1 // pred_check
      _
    $region11: #{lstm_emb.1} parent=1 // pred_check_branch
      %16 = sbr.rel (0) target = $region13
    $region12: #{lstm_emb.1} parent=1 // pred_region
      _
    $region13: #{lstm_emb.1} parent=1 // pred_fallthru
      _
    // Predicated region
    $region14: #{lstm_emb.1} parent=1 // pred_check
      _
    $region15: #{lstm_emb.1} parent=1 // pred_check_branch
      %18 = sbr.rel (0) target = $region17
    $region16: #{lstm_emb.1} parent=1 // pred_region
      _
    $region17: #{lstm_emb.1} parent=1 // pred_fallthru
      _
    // Predicated region
    $region18: #{lstm_emb.1} parent=1 // pred_check
      _
    $region19: #{lstm_emb.1} parent=1 // pred_check_branch
      %20 = sbr.rel (0) target = $region21
    $region20: #{lstm_emb.1} parent=1 // pred_region
      _
    $region21: #{lstm_emb.1} parent=1 // pred_fallthru
      _
    %v21 = vld [vmem:[%s0] sm:$0xff]
    %v22 = vld [vmem:[%s2] sm:$0xff]
    %v23 = vld [vmem:[%s2 + $0x8] sm:$0xff]
    %v24 = vld [vmem:[%s1] sm:$0xff]
    %v25 = vld [vmem:[%s3] sm:$0x3]
    %vm26 = vcmask 15360
    %v28 = vsel %vm26, %v24, 0
    %vm30 = vcmask 1041408
    %v32 = vsel %vm30, %v25, 0
    %34 = vmatprep.subr.mxu0 0.0
    %35 = vmatpush1.msra.mxu0 %v32
    %36 = vmatprep.subr.mxu0 0.0
    %37 = vmatpush1.msra.mxu0 0.0
    %38 = vmatprep.subr.mxu0 0.0
    %39 = vmatpush1.msra.mxu0 0.0
    %40 = vmatprep.subr.mxu0 0.0
    %41 = vmatpush1.msra.mxu0 0.0
    %42 = vmatprep.subr.mxu0 0.0
    %43 = vmatpush1.msra.mxu0 0.0
    %44 = vmatprep.subr.mxu0 0.0
    %45 = vmatpush1.msra.mxu0 0.0
    %46 = vmatprep.subr.mxu0 0.0
    %47 = vmatpush1.msra.mxu0 0.0
    %48 = vmatprep.subr.mxu0 0.0
    %49 = vmatpush1.msra.mxu0 0.0
    %50 = vmatprep.subr.mxu0 0.0
    %51 = vmatpush1.msra.mxu0 0.0
    %52 = vmatprep.subr.mxu0 0.0
    %53 = vmatpush1.msra.mxu0 0.0
    %54 = vmatprep.subr.mxu0 0.0
    %55 = vmatpush1.msra.mxu0 0.0
    %56 = vmatprep.subr.mxu0 0.0
    %57 = vmatpush1.msra.mxu0 0.0
    %58 = vmatprep.subr.mxu0 0.0
    %59 = vmatpush1.msra.mxu0 0.0
    %60 = vmatprep.subr.mxu0 0.0
    %61 = vmatpush1.msra.mxu0 0.0
    %62 = vmatprep.subr.mxu0 0.0
    %63 = vmatpush1.msra.mxu0 0.0
    %64 = vmatprep.subr.mxu0 0.0
    %65 = vmatpush1.msra.mxu0 0.0
    %66 = vmatprep.subr.mxu0 0.0
    %67 = vmatpush1.msra.mxu0 0.0
    %68 = vmatprep.subr.mxu0 0.0
    %69 = vmatpush1.msra.mxu0 0.0
    %70 = vmatprep.subr.mxu0 0.0
    %71 = vmatpush1.msra.mxu0 0.0
    %72 = vmatprep.subr.mxu0 0.0
    %73 = vmatpush1.msra.mxu0 0.0
    %74 = vmatprep.subr.mxu0 0.0
    %75 = vmatpush1.msra.mxu0 0.0
    %76 = vmatprep.subr.mxu0 0.0
    %77 = vmatpush1.msra.mxu0 0.0
    %78 = vmatprep.subr.mxu0 0.0
    %79 = vmatpush1.msra.mxu0 0.0
    %80 = vmatprep.subr.mxu0 0.0
    %81 = vmatpush1.msra.mxu0 0.0
    %82 = vmatprep.subr.mxu0 0.0
    %83 = vmatpush1.msra.mxu0 0.0
    %84 = vmatprep.subr.mxu0 0.0
    %85 = vmatpush1.msra.mxu0 0.0
    %86 = vmatprep.subr.mxu0 0.0
    %87 = vmatpush1.msra.mxu0 0.0
    %88 = vmatprep.subr.mxu0 0.0
    %89 = vmatpush1.msra.mxu0 0.0
    %90 = vmatprep.subr.mxu0 0.0
    %91 = vmatpush1.msra.mxu0 0.0
    %92 = vmatprep.subr.mxu0 0.0
    %93 = vmatpush1.msra.mxu0 0.0
    %94 = vmatprep.subr.mxu0 0.0
    %95 = vmatpush1.msra.mxu0 0.0
    %96 = vmatprep.subr.mxu0 0.0
    %97 = vmatpush1.msra.mxu0 0.0
    %98 = vmatprep.mubr.f32.mxu0 0.0
    %99 = vmatmul.mubr.f32.gmra.mrb[0].mxu0 %v28
    %v100 = vpop.f32.mrb[0].mxu0
    %v101 = vadd.f32 0.0, %v100
    %v102 = vpop.f32.mrb[0].mxu0
    %103 = vdwg.mxu0
    %vm104 = vcmask 130048
    %v106 = vsel %vm104, %v21, 0
    %108 = vmatprep.subr.mxu0 0.0
    %109 = vmatpush1.msra.mxu0 %v22
    %110 = vmatprep.subr.mxu0 0.0
    %111 = vmatpush1.msra.mxu0 %v23
    %112 = vmatprep.subr.mxu0 0.0
    %113 = vmatpush1.msra.mxu0 0.0
    %114 = vmatprep.subr.mxu0 0.0
    %115 = vmatpush1.msra.mxu0 0.0
    %116 = vmatprep.subr.mxu0 0.0
    %117 = vmatpush1.msra.mxu0 0.0
    %118 = vmatprep.subr.mxu0 0.0
    %119 = vmatpush1.msra.mxu0 0.0
    %120 = vmatprep.subr.mxu0 0.0
    %121 = vmatpush1.msra.mxu0 0.0
    %122 = vmatprep.subr.mxu0 0.0
    %123 = vmatpush1.msra.mxu0 0.0
    %124 = vmatprep.subr.mxu0 0.0
    %125 = vmatpush1.msra.mxu0 0.0
    %126 = vmatprep.subr.mxu0 0.0
    %127 = vmatpush1.msra.mxu0 0.0
    %128 = vmatprep.subr.mxu0 0.0
    %129 = vmatpush1.msra.mxu0 0.0
    %130 = vmatprep.subr.mxu0 0.0
    %131 = vmatpush1.msra.mxu0 0.0
    %132 = vmatprep.subr.mxu0 0.0
    %133 = vmatpush1.msra.mxu0 0.0
    %134 = vmatprep.subr.mxu0 0.0
    %135 = vmatpush1.msra.mxu0 0.0
    %136 = vmatprep.subr.mxu0 0.0
    %137 = vmatpush1.msra.mxu0 0.0
    %138 = vmatprep.subr.mxu0 0.0
    %139 = vmatpush1.msra.mxu0 0.0
    %140 = vmatprep.subr.mxu0 0.0
    %141 = vmatpush1.msra.mxu0 0.0
    %142 = vmatprep.subr.mxu0 0.0
    %143 = vmatpush1.msra.mxu0 0.0
    %144 = vmatprep.subr.mxu0 0.0
    %145 = vmatpush1.msra.mxu0 0.0
    %146 = vmatprep.subr.mxu0 0.0
    %147 = vmatpush1.msra.mxu0 0.0
    %148 = vmatprep.subr.mxu0 0.0
    %149 = vmatpush1.msra.mxu0 0.0
    %150 = vmatprep.subr.mxu0 0.0
    %151 = vmatpush1.msra.mxu0 0.0
    %152 = vmatprep.subr.mxu0 0.0
    %153 = vmatpush1.msra.mxu0 0.0
    %154 = vmatprep.subr.mxu0 0.0
    %155 = vmatpush1.msra.mxu0 0.0
    %156 = vmatprep.subr.mxu0 0.0
    %157 = vmatpush1.msra.mxu0 0.0
    %158 = vmatprep.subr.mxu0 0.0
    %159 = vmatpush1.msra.mxu0 0.0
    %160 = vmatprep.subr.mxu0 0.0
    %161 = vmatpush1.msra.mxu0 0.0
    %162 = vmatprep.subr.mxu0 0.0
    %163 = vmatpush1.msra.mxu0 0.0
    %164 = vmatprep.subr.mxu0 0.0
    %165 = vmatpush1.msra.mxu0 0.0
    %166 = vmatprep.subr.mxu0 0.0
    %167 = vmatpush1.msra.mxu0 0.0
    %168 = vmatprep.subr.mxu0 0.0
    %169 = vmatpush1.msra.mxu0 0.0
    %170 = vmatprep.subr.mxu0 0.0
    %171 = vmatpush1.msra.mxu0 0.0
    %172 = vmatprep.mubr.f32.mxu0 0.0
    %173 = vmatmul.mubr.f32.gmra.mrb[0].mxu0 %v106
    %v174 = vpop.f32.mrb[0].mxu0
    %v175 = vadd.f32 %v101, %v174
    %v176 = vpop.f32.mrb[0].mxu0
    %177 = vdwg.mxu0
    %v178 = vld [vmem:[%s4] sm:$0x1]
    %v180 = vlaneseq
    %v181 = vshrl.u32 %v180, 7
    %v182 = vsub.s32 0, %v181
    %v183 = vrot.slane %v178, %v182
    %v185 = vadd.f32 %v175, %v183
    %vm186 = vcmask 261120
    %187 = vst.msk [vmem:[#allocation2] sm:$0xff] %vm186, %v185
    // Predicated region
    $region22: #{lstm_emb.1} parent=1 // pred_check
      _
    $region23: #{lstm_emb.1} parent=1 // pred_check_branch
      %189 = sbr.rel (0) target = $region25
    $region24: #{lstm_emb.1} parent=1 // pred_region
      %s191 = ssub.s32 128, 128
      %192 = vsyncadd [#allocation3], %s191
      %s194 = sshll.u32 [#allocation2], 4
      %s195 = int_to_ptr.vmem [resolvable:$true] %s194
      %197 = dma.vmem_to_hbm [thread:$0]  %s195, 128, %s5, [#allocation3]
    $region25: #{lstm_emb.1} parent=1 // pred_fallthru
      _
    // Predicated region
    $region26: #{lstm_emb.1} parent=1 // pred_check
      _
    $region27: #{lstm_emb.1} parent=1 // pred_check_branch
      %199 = sbr.rel (0) target = $region29
    $region28: #{lstm_emb.1} parent=1 // pred_region
      %200 = dma.done [#allocation3], 128
    $region29: #{lstm_emb.1} parent=1 // pred_fallthru
      _
    %201 = vsyncpa [#allocation3], 1

</llo_original>
